<compile_context>
chip_gen: v5e
topology: v5e:2x2
jax: 0.10.0
libtpu: 0.0.40
codegen_flags: <defaults>
</compile_context>

<pallas_src>
import functools

import jax
import jax.numpy as jnp
from jax.experimental import pallas as pl
from jax.experimental.pallas import tpu as pltpu

_LANE = 128
_NUM_LAYERS = 5
_MAX_BATCH_TILE = 2048
_BATCH_ALIGN = 16            # bf16 sublane packing
_ACTS = ("sigmoid", "tanh", "sigmoid", "tanh", "leaky_relu")


def _round_up(n, m):
    return (n + m - 1) // m * m


def _mlp_kernel(x_ref, w_ref, b_ref, o_ref):
    """Fused 5-layer MLP forward on one batch tile.

    x_ref : [TB, in_features]   bf16  natural-width activations
    w_ref : [5, 128, 128]       bf16  packed, zero-padded, sigmoid-folded W^T
    b_ref : [8, 128]            f32   rows 0..4 = folded, zero-padded biases
    o_ref : [TB, out_features]  f32   natural-width output
    """
    tb, in_f = x_ref.shape
    out_f = o_ref.shape[1]

    h = x_ref[...].astype(jnp.bfloat16)
    if in_f < _LANE:
        # Zero-extend to 128 lanes in VMEM (padded weight rows are zero anyway).
        h = jnp.concatenate([h, jnp.zeros((tb, _LANE - in_f), jnp.bfloat16)], axis=1)

    # Hidden layers: after the sigmoid-affine fold, every hidden layer is one
    # matmul + bias + tanh (single EUP op, no extra VPU work).
    for layer in range(_NUM_LAYERS - 1):
        z = jnp.dot(h, w_ref[layer], preferred_element_type=jnp.float32) + b_ref[layer]
        h = jnp.tanh(z).astype(jnp.bfloat16)

    # Output layer: leaky_relu (PyTorch default negative_slope = 0.01), exact.
    z = jnp.dot(h, w_ref[_NUM_LAYERS - 1],
                preferred_element_type=jnp.float32) + b_ref[_NUM_LAYERS - 1]
    z = z[:, :out_f]
    o_ref[...] = jnp.where(z >= 0.0, z, 0.01 * z).astype(o_ref.dtype)


def pack_params(params):
    """Pack 5 layers into [5,128,128] bf16 + [8,128] f32 slabs, folding the
    sigmoid affine wrappers (sigmoid(z) = 0.5*tanh(0.5*z) + 0.5) into the
    packed weights/biases so the kernel only ever evaluates tanh/leaky_relu.

    params: list of 5 (W_t, b) with W_t shaped [in, out] (== PyTorch W.T).
    """
    assert len(params) == _NUM_LAYERS
    assert _ACTS[-1] != "sigmoid"  # final deferred affine would otherwise be lost

    w_rows, b_rows = [], []
    scale_in, shift_in = 1.0, 0.0          # pending affine from the previous layer
    for (w, b), act in zip(params, _ACTS):
        in_d, out_d = w.shape
        assert in_d <= _LANE and out_d <= _LANE, "layer widths must be <= 128"
        # Match the kernel's bf16 weights so the fold constant is consistent.
        w_q = w.astype(jnp.bfloat16).astype(jnp.float32)
        b_f = jnp.reshape(b, (-1,)).astype(jnp.float32)

        w_eff = scale_in * w_q
        b_eff = b_f + shift_in * jnp.sum(w_q, axis=0)
        if act == "sigmoid":
            # Absorb the 0.5*z here; defer the (0.5*a + 0.5) into the next layer.
            w_eff = 0.5 * w_eff
            b_eff = 0.5 * b_eff
            scale_in, shift_in = 0.5, 0.5
        else:
            scale_in, shift_in = 1.0, 0.0

        w_p = jnp.zeros((_LANE, _LANE), jnp.bfloat16).at[:in_d, :out_d].set(
            w_eff.astype(jnp.bfloat16))
        b_p = jnp.zeros((_LANE,), jnp.float32).at[:out_d].set(b_eff)
        w_rows.append(w_p)
        b_rows.append(b_p)

    w_packed = jnp.stack(w_rows)                                         # [5,128,128] bf16
    b_packed = jnp.zeros((8, _LANE), jnp.float32).at[:_NUM_LAYERS].set(jnp.stack(b_rows))
    return w_packed, b_packed


def _choose_tiles(batch, max_tile=_MAX_BATCH_TILE):
    """Pick (tile_rows, padded_batch, grid) with <= ~15 padded rows per tile and
    >= 2 tiles for large batches so v7x's two TensorCores both get work."""
    n_tiles = max(1, -(-batch // max_tile))
    if n_tiles == 1 and batch >= 1024:
        n_tiles = 2
    tb = _round_up(-(-batch // n_tiles), _BATCH_ALIGN)
    batch_pad = _round_up(batch, tb)
    return tb, batch_pad, batch_pad // tb


def make_net_forward(params, *, max_batch_tile=_MAX_BATCH_TILE):
    """Pack parameters once; return a jitted forward(x) closure."""
    w_packed, b_packed = pack_params(params)
    out_features = params[-1][0].shape[1]

    @jax.jit
    def forward(x):
        batch, in_features = x.shape
        tb, batch_pad, grid = _choose_tiles(batch, max_batch_tile)

        x_p = x.astype(jnp.bfloat16)                 # halve input-side HBM read
        if batch_pad != batch:
            x_p = jnp.pad(x_p, ((0, batch_pad - batch), (0, 0)))

        out = pl.pallas_call(
            _mlp_kernel,
            out_shape=jax.ShapeDtypeStruct((batch_pad, out_features), jnp.float32),
            grid_spec=pltpu.PrefetchScalarGridSpec(
                num_scalar_prefetch=0,
                grid=(grid,),
                in_specs=[
                    # natural-width x tile (block last dim == full array dim)
                    pl.BlockSpec((tb, in_features), lambda i: (i, 0)),
                    # packed weights / biases: constant index -> VMEM-resident
                    pl.BlockSpec((_NUM_LAYERS, _LANE, _LANE), lambda i: (0, 0, 0)),
                    pl.BlockSpec((8, _LANE), lambda i: (0, 0)),
                ],
                out_specs=pl.BlockSpec((tb, out_features), lambda i: (i, 0)),
            ),
            compiler_params=pltpu.CompilerParams(
                dimension_semantics=("parallel",),       # shard batch tiles over TCs
                vmem_limit_bytes=32 * 1024 * 1024,       # safe on v5e/v6e/v7x
            ),
        )(x_p, w_packed, b_packed)

        return out[:batch] if batch_pad != batch else out

    return forward


def net_forward(x, params, *, max_batch_tile=_MAX_BATCH_TILE):
    """One-shot convenience wrapper (packs params on every call)."""
    return make_net_forward(params, max_batch_tile=max_batch_tile)(x)


def init_linear_params(key, in_size, out_size):
    """Deterministic init mimicking nn.Linear's U(-1/sqrt(in), 1/sqrt(in)).
    Stored directly as W_t [in, out] (transposed vs. PyTorch's [out, in])."""
    kw, kb = jax.random.split(key)
    bound = 1.0 / jnp.sqrt(jnp.float32(in_size))
    w_t = jax.random.uniform(kw, (in_size, out_size), jnp.float32, -bound, bound)
    b = jax.random.uniform(kb, (out_size,), jnp.float32, -bound, bound)
    return w_t, b


if __name__ == "__main__":
    # Net(input_size=16, hidden_size=[32, 64, 32, 16], output_size=8)
    input_size = 16
    hidden_size = [32, 64, 32, 16]
    output_size = 8
    batch = 8

    key = jax.random.PRNGKey(0)
    keys = jax.random.split(key, 6)

    sizes = [input_size] + hidden_size + [output_size]
    params = [init_linear_params(keys[i], sizes[i], sizes[i + 1]) for i in range(_NUM_LAYERS)]

    net = make_net_forward(params)
    x = jax.random.normal(keys[5], (batch, input_size), jnp.float32)

    y = jax.block_until_ready(net(x))
    assert y.shape == (batch, output_size)

    def _leaky(v):
        return jnp.where(v >= 0, v, 0.01 * v)

    acts = [jax.nn.sigmoid, jnp.tanh, jax.nn.sigmoid, jnp.tanh, _leaky]

    # Reference 1: bf16-rounded weights/activations, f32 math, explicit sigmoid
    # (mirrors the kernel's numerics; tight check).
    h = x
    for (w, b), act in zip(params, acts):
        z = jnp.dot(h.astype(jnp.bfloat16).astype(jnp.float32),
                    w.astype(jnp.bfloat16).astype(jnp.float32)) + b.reshape(1, -1)
        h = act(z)
    assert jnp.allclose(y, h, atol=2e-3, rtol=2e-3)

    # Reference 2: pure-f32 forward == original PyTorch semantics (loose: bf16 weights).
    h32 = x
    for (w, b), act in zip(params, acts):
        h32 = act(h32 @ w + b.reshape(1, -1))
    assert jnp.allclose(y, h32, atol=2e-2, rtol=2e-2)

    print("KERNEL_OK")
</pallas_src>

<mosaic_0001>
module attributes {stable_mosaic.version = 11 : i64} {
  func.func @_mlp_kernel(%arg0: i32, %arg1: memref<16x16xbf16, #tpu.memory_space<vmem>>, %arg2: memref<5x128x128xbf16, #tpu.memory_space<vmem>>, %arg3: memref<8x128xf32, #tpu.memory_space<vmem>>, %arg4: memref<16x8xf32, #tpu.memory_space<vmem>>) attributes {dimension_semantics = [#tpu.dimension_semantics<parallel>], iteration_bounds = array<i64: 1>, scalar_prefetch = 0 : i64, scratch_operands = 0 : i64, tpu.core_type = #tpu.core_type<tc>, window_params = [{transform_indices = @transform_0, window_bounds = array<i64: 16, 16>}, {pipeline_mode = #tpu.pipeline_mode<synchronous>, transform_indices = @transform_1, window_bounds = array<i64: 5, 128, 128>}, {pipeline_mode = #tpu.pipeline_mode<synchronous>, transform_indices = @transform_2, window_bounds = array<i64: 8, 128>}, {transform_indices = @transform_3, window_bounds = array<i64: 16, 8>}]} {
    %c0 = arith.constant 0 : index
    %c0_0 = arith.constant 0 : index
    %0 = vector.load %arg1[%c0, %c0_0] : memref<16x16xbf16, #tpu.memory_space<vmem>>, vector<16x16xbf16>
    %cst = arith.constant 0.000000e+00 : bf16
    %1 = vector.broadcast %cst : bf16 to vector<16x112xbf16>
    %2 = tpu.concatenate %0, %1 in 1 : vector<16x16xbf16>, vector<16x112xbf16> -> vector<16x128xbf16>
    %c0_1 = arith.constant 0 : index
    %c0_2 = arith.constant 0 : index
    %c0_3 = arith.constant 0 : index
    %3 = vector.load %arg2[%c0_1, %c0_2, %c0_3] : memref<5x128x128xbf16, #tpu.memory_space<vmem>>, vector<1x128x128xbf16>
    %4 = vector.shape_cast %3 : vector<1x128x128xbf16> to vector<128x128xbf16>
    %cst_4 = arith.constant dense<0.000000e+00> : vector<16x128xf32>
    %5 = tpu.matmul %2, %4, %cst_4 {dimension_numbers = #tpu.dot_dimension_numbers<[1], [0], [0], [1], [0, 0, 1, 1], [], []>} : vector<16x128xbf16>, vector<128x128xbf16>, vector<16x128xf32> -> vector<16x128xf32>
    %c0_5 = arith.constant 0 : index
    %c0_6 = arith.constant 0 : index
    %6 = vector.load %arg3[%c0_5, %c0_6] : memref<8x128xf32, #tpu.memory_space<vmem>>, vector<1x128xf32>
    %7 = vector.shape_cast %6 : vector<1x128xf32> to vector<128xf32>
    %8 = vector.shape_cast %7 : vector<128xf32> to vector<1x128xf32>
    %9 = vector.broadcast %8 : vector<1x128xf32> to vector<16x128xf32>
    %10 = arith.addf %5, %9 : vector<16x128xf32>
    %11 = math.tanh %10 : vector<16x128xf32>
    %12 = arith.truncf %11 : vector<16x128xf32> to vector<16x128xbf16>
    %c1 = arith.constant 1 : index
    %c0_7 = arith.constant 0 : index
    %c0_8 = arith.constant 0 : index
    %13 = vector.load %arg2[%c1, %c0_7, %c0_8] : memref<5x128x128xbf16, #tpu.memory_space<vmem>>, vector<1x128x128xbf16>
    %14 = vector.shape_cast %13 : vector<1x128x128xbf16> to vector<128x128xbf16>
    %cst_9 = arith.constant dense<0.000000e+00> : vector<16x128xf32>
    %15 = tpu.matmul %12, %14, %cst_9 {dimension_numbers = #tpu.dot_dimension_numbers<[1], [0], [0], [1], [0, 0, 1, 1], [], []>} : vector<16x128xbf16>, vector<128x128xbf16>, vector<16x128xf32> -> vector<16x128xf32>
    %c1_10 = arith.constant 1 : index
    %c0_11 = arith.constant 0 : index
    %16 = vector.load %arg3[%c1_10, %c0_11] : memref<8x128xf32, #tpu.memory_space<vmem>>, vector<1x128xf32>
    %17 = vector.shape_cast %16 : vector<1x128xf32> to vector<128xf32>
    %18 = vector.shape_cast %17 : vector<128xf32> to vector<1x128xf32>
    %19 = vector.broadcast %18 : vector<1x128xf32> to vector<16x128xf32>
    %20 = arith.addf %15, %19 : vector<16x128xf32>
    %21 = math.tanh %20 : vector<16x128xf32>
    %22 = arith.truncf %21 : vector<16x128xf32> to vector<16x128xbf16>
    %c2 = arith.constant 2 : index
    %c0_12 = arith.constant 0 : index
    %c0_13 = arith.constant 0 : index
    %23 = vector.load %arg2[%c2, %c0_12, %c0_13] : memref<5x128x128xbf16, #tpu.memory_space<vmem>>, vector<1x128x128xbf16>
    %24 = vector.shape_cast %23 : vector<1x128x128xbf16> to vector<128x128xbf16>
    %cst_14 = arith.constant dense<0.000000e+00> : vector<16x128xf32>
    %25 = tpu.matmul %22, %24, %cst_14 {dimension_numbers = #tpu.dot_dimension_numbers<[1], [0], [0], [1], [0, 0, 1, 1], [], []>} : vector<16x128xbf16>, vector<128x128xbf16>, vector<16x128xf32> -> vector<16x128xf32>
    %c2_15 = arith.constant 2 : index
    %c0_16 = arith.constant 0 : index
    %26 = vector.load %arg3[%c2_15, %c0_16] : memref<8x128xf32, #tpu.memory_space<vmem>>, vector<1x128xf32>
    %27 = vector.shape_cast %26 : vector<1x128xf32> to vector<128xf32>
    %28 = vector.shape_cast %27 : vector<128xf32> to vector<1x128xf32>
    %29 = vector.broadcast %28 : vector<1x128xf32> to vector<16x128xf32>
    %30 = arith.addf %25, %29 : vector<16x128xf32>
    %31 = math.tanh %30 : vector<16x128xf32>
    %32 = arith.truncf %31 : vector<16x128xf32> to vector<16x128xbf16>
    %c3 = arith.constant 3 : index
    %c0_17 = arith.constant 0 : index
    %c0_18 = arith.constant 0 : index
    %33 = vector.load %arg2[%c3, %c0_17, %c0_18] : memref<5x128x128xbf16, #tpu.memory_space<vmem>>, vector<1x128x128xbf16>
    %34 = vector.shape_cast %33 : vector<1x128x128xbf16> to vector<128x128xbf16>
    %cst_19 = arith.constant dense<0.000000e+00> : vector<16x128xf32>
    %35 = tpu.matmul %32, %34, %cst_19 {dimension_numbers = #tpu.dot_dimension_numbers<[1], [0], [0], [1], [0, 0, 1, 1], [], []>} : vector<16x128xbf16>, vector<128x128xbf16>, vector<16x128xf32> -> vector<16x128xf32>
    %c3_20 = arith.constant 3 : index
    %c0_21 = arith.constant 0 : index
    %36 = vector.load %arg3[%c3_20, %c0_21] : memref<8x128xf32, #tpu.memory_space<vmem>>, vector<1x128xf32>
    %37 = vector.shape_cast %36 : vector<1x128xf32> to vector<128xf32>
    %38 = vector.shape_cast %37 : vector<128xf32> to vector<1x128xf32>
    %39 = vector.broadcast %38 : vector<1x128xf32> to vector<16x128xf32>
    %40 = arith.addf %35, %39 : vector<16x128xf32>
    %41 = math.tanh %40 : vector<16x128xf32>
    %42 = arith.truncf %41 : vector<16x128xf32> to vector<16x128xbf16>
    %c4 = arith.constant 4 : index
    %c0_22 = arith.constant 0 : index
    %c0_23 = arith.constant 0 : index
    %43 = vector.load %arg2[%c4, %c0_22, %c0_23] : memref<5x128x128xbf16, #tpu.memory_space<vmem>>, vector<1x128x128xbf16>
    %44 = vector.shape_cast %43 : vector<1x128x128xbf16> to vector<128x128xbf16>
    %cst_24 = arith.constant dense<0.000000e+00> : vector<16x128xf32>
    %45 = tpu.matmul %42, %44, %cst_24 {dimension_numbers = #tpu.dot_dimension_numbers<[1], [0], [0], [1], [0, 0, 1, 1], [], []>} : vector<16x128xbf16>, vector<128x128xbf16>, vector<16x128xf32> -> vector<16x128xf32>
    %c4_25 = arith.constant 4 : index
    %c0_26 = arith.constant 0 : index
    %46 = vector.load %arg3[%c4_25, %c0_26] : memref<8x128xf32, #tpu.memory_space<vmem>>, vector<1x128xf32>
    %47 = vector.shape_cast %46 : vector<1x128xf32> to vector<128xf32>
    %48 = vector.shape_cast %47 : vector<128xf32> to vector<1x128xf32>
    %49 = vector.broadcast %48 : vector<1x128xf32> to vector<16x128xf32>
    %50 = arith.addf %45, %49 : vector<16x128xf32>
    %51 = vector.extract_strided_slice %50 {offsets = [0, 0], sizes = [16, 8], strides = [1, 1]} : vector<16x128xf32> to vector<16x8xf32>
    %cst_27 = arith.constant 0.000000e+00 : f32
    %52 = vector.broadcast %cst_27 : f32 to vector<16x8xf32>
    %53 = arith.cmpf oge, %51, %52 : vector<16x8xf32>
    %cst_28 = arith.constant 0.00999999977 : f32
    %54 = vector.broadcast %cst_28 : f32 to vector<16x8xf32>
    %55 = arith.mulf %54, %51 : vector<16x8xf32>
    %56 = arith.select %53, %51, %55 : vector<16x8xi1>, vector<16x8xf32>
    %c0_29 = arith.constant 0 : index
    %c0_30 = arith.constant 0 : index
    %57 = vector.load %arg4[%c0_29, %c0_30] : memref<16x8xf32, #tpu.memory_space<vmem>>, vector<16x8xf32>
    tpu.vector_store %arg4[%c0_29, %c0_30], %56 {strides = array<i32>} : memref<16x8xf32, #tpu.memory_space<vmem>>, vector<16x8xf32>,
    return
  }
  func.func @transform_0(%arg0: i32) -> (i32, i32) {
    %c0_i32 = arith.constant 0 : i32
    %c0_i32_0 = arith.constant 0 : i32
    return %arg0, %c0_i32 : i32, i32
  }
  func.func @transform_1(%arg0: i32) -> (i32, i32, i32) {
    %c0_i32 = arith.constant 0 : i32
    %c0_i32_0 = arith.constant 0 : i32
    %c0_i32_1 = arith.constant 0 : i32
    %c0_i32_2 = arith.constant 0 : i32
    return %c0_i32, %c0_i32_0, %c0_i32_1 : i32, i32, i32
  }
  func.func @transform_2(%arg0: i32) -> (i32, i32) {
    %c0_i32 = arith.constant 0 : i32
    %c0_i32_0 = arith.constant 0 : i32
    %c0_i32_1 = arith.constant 0 : i32
    return %c0_i32, %c0_i32_0 : i32, i32
  }
  func.func @transform_3(%arg0: i32) -> (i32, i32) {
    %c0_i32 = arith.constant 0 : i32
    %c0_i32_0 = arith.constant 0 : i32
    return %arg0, %c0_i32 : i32, i32
  }
}

</mosaic_0001>

<llo_original>
// kernel: forward.1
$region0: #{forward.1}
  #allocation0 [shape = 'u32[]', space=smem, size = 0x4, offset = 0x4, fixed_abs, tag = 'smem constant byte address 0x4 - core index']
  #allocation1 [shape = 'u32[72,128]{1,0:T(1,128)}', space=vmem, size = 0x9000, scoped, tag = 'internal scratch']
  %s0 = inlined_call_operand.vmem [shape: bf16[16,16], index: 0, kind: input, shape index: {}]
  %s1 = inlined_call_operand.hbm [shape: bf16[5,128,128], index: 1, kind: input, shape index: {}]
  %s2 = inlined_call_operand.vmem [shape: f32[8,128], index: 2, kind: input, shape index: {}]
  %s3 = inlined_call_operand.vmem [shape: f32[16,8], index: 3, kind: output, shape index: {}]
  %s4 = sld [smem:[#allocation0]]
  $region26: #{forward.1} parent=0
    _
  %s6 = ssub.s32 1, %s4
  %s7 = scalar_select 0, %s6, %s4
  $region1: #{forward.1} parent=0
    #allocation2 [shape = 'u8[163840]{0}', space=vmem, size = 0x28000, scoped, tag = 'input window, operand 1, single buffered']
    #allocation3 [shape = 's32[1]{0}', space=sflag, size = 0x4, scoped, tag = 'scoped memory for forward.1']
    %8 = vsyncpa [#allocation3], 0
    // Predicated region
    $region2: #{forward.1} parent=1 // pred_check
      _
    $region3: #{forward.1} parent=1 // pred_check_branch
      %10 = sbr.rel (0) target = $region5
    $region4: #{forward.1} parent=1 // pred_region
      _
    $region5: #{forward.1} parent=1 // pred_fallthru
      _
    // Predicated region
    $region6: #{forward.1} parent=1 // pred_check
      _
    $region7: #{forward.1} parent=1 // pred_check_branch
      %12 = sbr.rel (0) target = $region9
    $region8: #{forward.1} parent=1 // pred_region
      %14 = vsyncadd [#allocation3], 0
      %s15 = sshll.u32 %s1, 4
      %s16 = int_to_ptr.hbm [resolvable:$true] %s15
      %s17 = sshll.u32 [#allocation2], 4
      %s18 = int_to_ptr.vmem [resolvable:$true] %s17
      %23 = dma.hbm_to_vmem [thread:$0]  %s16, 5120, %s18, [#allocation3], 64, 64, 4
    $region9: #{forward.1} parent=1 // pred_fallthru
      _
    // Predicated region
    $region10: #{forward.1} parent=1 // pred_check
      _
    $region11: #{forward.1} parent=1 // pred_check_branch
      %25 = sbr.rel (0) target = $region13
    $region12: #{forward.1} parent=1 // pred_region
      _
    $region13: #{forward.1} parent=1 // pred_fallthru
      _
    // Predicated region
    $region14: #{forward.1} parent=1 // pred_check
      _
    $region15: #{forward.1} parent=1 // pred_check_branch
      %27 = sbr.rel (0) target = $region17
    $region16: #{forward.1} parent=1 // pred_region
      %29 = dma.done [#allocation3], 5120
    $region17: #{forward.1} parent=1 // pred_fallthru
      _
    %v31 = vld [vmem:[%s0] sm:$0xf]
    %v32 = vld [vmem:[%s0 + $0x4] sm:$0xf]
    %v35 = vunpack.c.l.b16 %v31
    %v36 = vunpack.c.l.b16 %v32
    %v37 = vpack.c.b16 %v36, %v35
    %vm38 = vcmask 130048
    %v41 = vsel %vm38, %v37, 0
    %v43 = vld [vmem:[#allocation2] sm:$0xf]
    %v44 = vld [vmem:[#allocation2 + $0x4] sm:$0xf]
    %v45 = vld [vmem:[#allocation2 + $0x8] sm:$0xf]
    %v46 = vld [vmem:[#allocation2 + $0xc] sm:$0xf]
    %v47 = vld [vmem:[#allocation2 + $0x10] sm:$0xf]
    %v48 = vld [vmem:[#allocation2 + $0x14] sm:$0xf]
    %v49 = vld [vmem:[#allocation2 + $0x18] sm:$0xf]
    %v50 = vld [vmem:[#allocation2 + $0x1c] sm:$0xf]
    %v51 = vld [vmem:[#allocation2 + $0x20] sm:$0xf]
    %v52 = vld [vmem:[#allocation2 + $0x24] sm:$0xf]
    %v53 = vld [vmem:[#allocation2 + $0x28] sm:$0xf]
    %v54 = vld [vmem:[#allocation2 + $0x2c] sm:$0xf]
    %v55 = vld [vmem:[#allocation2 + $0x30] sm:$0xf]
    %v56 = vld [vmem:[#allocation2 + $0x34] sm:$0xf]
    %v57 = vld [vmem:[#allocation2 + $0x38] sm:$0xf]
    %v58 = vld [vmem:[#allocation2 + $0x3c] sm:$0xf]
    %v59 = vld [vmem:[%s2] sm:$0x1]
    %v60 = vperm.slane %v59, 0
    %v77 = vunpack.c.l.b16 %v43
    %v78 = vunpack.c.l.b16 %v44
    %v79 = vunpack.c.l.b16 %v45
    %v80 = vunpack.c.l.b16 %v46
    %v81 = vunpack.c.l.b16 %v47
    %v82 = vunpack.c.l.b16 %v48
    %v83 = vunpack.c.l.b16 %v49
    %v84 = vunpack.c.l.b16 %v50
    %v85 = vunpack.c.l.b16 %v51
    %v86 = vunpack.c.l.b16 %v52
    %v87 = vunpack.c.l.b16 %v53
    %v88 = vunpack.c.l.b16 %v54
    %v89 = vunpack.c.l.b16 %v55
    %v90 = vunpack.c.l.b16 %v56
    %v91 = vunpack.c.l.b16 %v57
    %v92 = vunpack.c.l.b16 %v58
    %v93 = vpack.c.b16 %v78, %v77
    %v94 = vpack.c.b16 %v80, %v79
    %v95 = vpack.c.b16 %v82, %v81
    %v96 = vpack.c.b16 %v84, %v83
    %v97 = vpack.c.b16 %v86, %v85
    %v98 = vpack.c.b16 %v88, %v87
    %v99 = vpack.c.b16 %v90, %v89
    %v100 = vpack.c.b16 %v92, %v91
    %109 = vmatpush.bf16.msra.mxu0 %v100
    %110 = vmatpush.bf16.msra.mxu0 %v99
    %111 = vmatpush.bf16.msra.mxu0 %v98
    %112 = vmatpush.bf16.msra.mxu0 %v97
    %113 = vmatpush.bf16.msra.mxu0 %v96
    %114 = vmatpush.bf16.msra.mxu0 %v95
    %115 = vmatpush.bf16.msra.mxu0 %v94
    %116 = vmatpush.bf16.msra.mxu0 %v93
    %117 = vmatmul.bf16.gmra.mxu0 %v41
    %v118 = vpop.f32.mrf.mxu0
    %v119 = vadd.f32 %v60, %v118
    %v120 = vpop.f32.mrf.mxu0
    %v121 = vadd.f32 %v60, %v120
    %122 = vdwg.mxu0
    %v123 = vtanh.pop %v119
    %v124 = vtanh.pop %v121
    %v125 = vpack.c.bf16 %v124, %v123
    %s126 = scalar_lea.vmem [#allocation2], 64
    %v127 = vld [vmem:[%s126] sm:$0xf]
    %v128 = vld [vmem:[%s126 + $0x4] sm:$0xf]
    %v129 = vld [vmem:[%s126 + $0x8] sm:$0xf]
    %v130 = vld [vmem:[%s126 + $0xc] sm:$0xf]
    %v131 = vld [vmem:[%s126 + $0x10] sm:$0xf]
    %v132 = vld [vmem:[%s126 + $0x14] sm:$0xf]
    %v133 = vld [vmem:[%s126 + $0x18] sm:$0xf]
    %v134 = vld [vmem:[%s126 + $0x1c] sm:$0xf]
    %v135 = vld [vmem:[%s126 + $0x20] sm:$0xf]
    %v136 = vld [vmem:[%s126 + $0x24] sm:$0xf]
    %v137 = vld [vmem:[%s126 + $0x28] sm:$0xf]
    %v138 = vld [vmem:[%s126 + $0x2c] sm:$0xf]
    %v139 = vld [vmem:[%s126 + $0x30] sm:$0xf]
    %v140 = vld [vmem:[%s126 + $0x34] sm:$0xf]
    %v141 = vld [vmem:[%s126 + $0x38] sm:$0xf]
    %v142 = vld [vmem:[%s126 + $0x3c] sm:$0xf]
    %v143 = vld [vmem:[%s2 + $0x1] sm:$0x1]
    %v144 = vperm.slane %v143, 0
    %v161 = vunpack.c.l.b16 %v127
    %v162 = vunpack.c.l.b16 %v128
    %v163 = vunpack.c.l.b16 %v129
    %v164 = vunpack.c.l.b16 %v130
    %v165 = vunpack.c.l.b16 %v131
    %v166 = vunpack.c.l.b16 %v132
    %v167 = vunpack.c.l.b16 %v133
    %v168 = vunpack.c.l.b16 %v134
    %v169 = vunpack.c.l.b16 %v135
    %v170 = vunpack.c.l.b16 %v136
    %v171 = vunpack.c.l.b16 %v137
    %v172 = vunpack.c.l.b16 %v138
    %v173 = vunpack.c.l.b16 %v139
    %v174 = vunpack.c.l.b16 %v140
    %v175 = vunpack.c.l.b16 %v141
    %v176 = vunpack.c.l.b16 %v142
    %v177 = vpack.c.b16 %v162, %v161
    %v178 = vpack.c.b16 %v164, %v163
    %v179 = vpack.c.b16 %v166, %v165
    %v180 = vpack.c.b16 %v168, %v167
    %v181 = vpack.c.b16 %v170, %v169
    %v182 = vpack.c.b16 %v172, %v171
    %v183 = vpack.c.b16 %v174, %v173
    %v184 = vpack.c.b16 %v176, %v175
    %193 = vmatpush.bf16.msra.mxu0 %v184
    %194 = vmatpush.bf16.msra.mxu0 %v183
    %195 = vmatpush.bf16.msra.mxu0 %v182
    %196 = vmatpush.bf16.msra.mxu0 %v181
    %197 = vmatpush.bf16.msra.mxu0 %v180
    %198 = vmatpush.bf16.msra.mxu0 %v179
    %199 = vmatpush.bf16.msra.mxu0 %v178
    %200 = vmatpush.bf16.msra.mxu0 %v177
    %201 = vmatmul.bf16.gmra.mxu0 %v125
    %v202 = vpop.f32.mrf.mxu0
    %v203 = vadd.f32 %v144, %v202
    %v204 = vpop.f32.mrf.mxu0
    %v205 = vadd.f32 %v144, %v204
    %206 = vdwg.mxu0
    %v207 = vtanh.pop %v203
    %v208 = vtanh.pop %v205
    %v209 = vpack.c.bf16 %v208, %v207
    %s210 = scalar_lea.vmem [#allocation2], 128
    %v211 = vld [vmem:[%s210] sm:$0xf]
    %v212 = vld [vmem:[%s210 + $0x4] sm:$0xf]
    %v213 = vld [vmem:[%s210 + $0x8] sm:$0xf]
    %v214 = vld [vmem:[%s210 + $0xc] sm:$0xf]
    %v215 = vld [vmem:[%s210 + $0x10] sm:$0xf]
    %v216 = vld [vmem:[%s210 + $0x14] sm:$0xf]
    %v217 = vld [vmem:[%s210 + $0x18] sm:$0xf]
    %v218 = vld [vmem:[%s210 + $0x1c] sm:$0xf]
    %v219 = vld [vmem:[%s210 + $0x20] sm:$0xf]
    %v220 = vld [vmem:[%s210 + $0x24] sm:$0xf]
    %v221 = vld [vmem:[%s210 + $0x28] sm:$0xf]
    %v222 = vld [vmem:[%s210 + $0x2c] sm:$0xf]
    %v223 = vld [vmem:[%s210 + $0x30] sm:$0xf]
    %v224 = vld [vmem:[%s210 + $0x34] sm:$0xf]
    %v225 = vld [vmem:[%s210 + $0x38] sm:$0xf]
    %v226 = vld [vmem:[%s210 + $0x3c] sm:$0xf]
    %v227 = vld [vmem:[%s2 + $0x2] sm:$0x1]
    %v228 = vperm.slane %v227, 0
    %v245 = vunpack.c.l.b16 %v211
    %v246 = vunpack.c.l.b16 %v212
    %v247 = vunpack.c.l.b16 %v213
    %v248 = vunpack.c.l.b16 %v214
    %v249 = vunpack.c.l.b16 %v215
    %v250 = vunpack.c.l.b16 %v216
    %v251 = vunpack.c.l.b16 %v217
    %v252 = vunpack.c.l.b16 %v218
    %v253 = vunpack.c.l.b16 %v219
    %v254 = vunpack.c.l.b16 %v220
    %v255 = vunpack.c.l.b16 %v221
    %v256 = vunpack.c.l.b16 %v222
    %v257 = vunpack.c.l.b16 %v223
    %v258 = vunpack.c.l.b16 %v224
    %v259 = vunpack.c.l.b16 %v225
    %v260 = vunpack.c.l.b16 %v226
    %v261 = vpack.c.b16 %v246, %v245
    %v262 = vpack.c.b16 %v248, %v247
    %v263 = vpack.c.b16 %v250, %v249
    %v264 = vpack.c.b16 %v252, %v251
    %v265 = vpack.c.b16 %v254, %v253
    %v266 = vpack.c.b16 %v256, %v255
    %v267 = vpack.c.b16 %v258, %v257
    %v268 = vpack.c.b16 %v260, %v259
    %277 = vmatpush.bf16.msra.mxu0 %v268
    %278 = vmatpush.bf16.msra.mxu0 %v267
    %279 = vmatpush.bf16.msra.mxu0 %v266
    %280 = vmatpush.bf16.msra.mxu0 %v265
    %281 = vmatpush.bf16.msra.mxu0 %v264
    %282 = vmatpush.bf16.msra.mxu0 %v263
    %283 = vmatpush.bf16.msra.mxu0 %v262
    %284 = vmatpush.bf16.msra.mxu0 %v261
    %285 = vmatmul.bf16.gmra.mxu0 %v209
    %v286 = vpop.f32.mrf.mxu0
    %v287 = vadd.f32 %v228, %v286
    %v288 = vpop.f32.mrf.mxu0
    %v289 = vadd.f32 %v228, %v288
    %290 = vdwg.mxu0
    %v291 = vtanh.pop %v287
    %v292 = vtanh.pop %v289
    %v293 = vpack.c.bf16 %v292, %v291
    %s294 = scalar_lea.vmem [#allocation2], 192
    %v295 = vld [vmem:[%s294] sm:$0xf]
    %v296 = vld [vmem:[%s294 + $0x4] sm:$0xf]
    %v297 = vld [vmem:[%s294 + $0x8] sm:$0xf]
    %v298 = vld [vmem:[%s294 + $0xc] sm:$0xf]
    %v299 = vld [vmem:[%s294 + $0x10] sm:$0xf]
    %v300 = vld [vmem:[%s294 + $0x14] sm:$0xf]
    %v301 = vld [vmem:[%s294 + $0x18] sm:$0xf]
    %v302 = vld [vmem:[%s294 + $0x1c] sm:$0xf]
    %v303 = vld [vmem:[%s294 + $0x20] sm:$0xf]
    %v304 = vld [vmem:[%s294 + $0x24] sm:$0xf]
    %v305 = vld [vmem:[%s294 + $0x28] sm:$0xf]
    %v306 = vld [vmem:[%s294 + $0x2c] sm:$0xf]
    %v307 = vld [vmem:[%s294 + $0x30] sm:$0xf]
    %v308 = vld [vmem:[%s294 + $0x34] sm:$0xf]
    %v309 = vld [vmem:[%s294 + $0x38] sm:$0xf]
    %v310 = vld [vmem:[%s294 + $0x3c] sm:$0xf]
    %v311 = vld [vmem:[%s2 + $0x3] sm:$0x1]
    %v312 = vperm.slane %v311, 0
    %v329 = vunpack.c.l.b16 %v295
    %v330 = vunpack.c.l.b16 %v296
    %v331 = vunpack.c.l.b16 %v297
    %v332 = vunpack.c.l.b16 %v298
    %v333 = vunpack.c.l.b16 %v299
    %v334 = vunpack.c.l.b16 %v300
    %v335 = vunpack.c.l.b16 %v301
    %v336 = vunpack.c.l.b16 %v302
    %v337 = vunpack.c.l.b16 %v303
    %v338 = vunpack.c.l.b16 %v304
    %v339 = vunpack.c.l.b16 %v305
    %v340 = vunpack.c.l.b16 %v306
    %v341 = vunpack.c.l.b16 %v307
    %v342 = vunpack.c.l.b16 %v308
    %v343 = vunpack.c.l.b16 %v309
    %v344 = vunpack.c.l.b16 %v310
    %v345 = vpack.c.b16 %v330, %v329
    %v346 = vpack.c.b16 %v332, %v331
    %v347 = vpack.c.b16 %v334, %v333
    %v348 = vpack.c.b16 %v336, %v335
    %v349 = vpack.c.b16 %v338, %v337
    %v350 = vpack.c.b16 %v340, %v339
    %v351 = vpack.c.b16 %v342, %v341
    %v352 = vpack.c.b16 %v344, %v343
    %361 = vmatpush.bf16.msra.mxu0 %v352
    %362 = vmatpush.bf16.msra.mxu0 %v351
    %363 = vmatpush.bf16.msra.mxu0 %v350
    %364 = vmatpush.bf16.msra.mxu0 %v349
    %365 = vmatpush.bf16.msra.mxu0 %v348
    %366 = vmatpush.bf16.msra.mxu0 %v347
    %367 = vmatpush.bf16.msra.mxu0 %v346
    %368 = vmatpush.bf16.msra.mxu0 %v345
    %369 = vmatmul.bf16.gmra.mxu0 %v293
    %v370 = vpop.f32.mrf.mxu0
    %v371 = vadd.f32 %v312, %v370
    %v372 = vpop.f32.mrf.mxu0
    %v373 = vadd.f32 %v312, %v372
    %374 = vdwg.mxu0
    %v375 = vtanh.pop %v371
    %v376 = vtanh.pop %v373
    %v377 = vpack.c.bf16 %v376, %v375
    %s378 = scalar_lea.vmem [#allocation2], 256
    %v379 = vld [vmem:[%s378] sm:$0xf]
    %v380 = vld [vmem:[%s378 + $0x4] sm:$0xf]
    %v381 = vld [vmem:[%s378 + $0x8] sm:$0xf]
    %v382 = vld [vmem:[%s378 + $0xc] sm:$0xf]
    %v383 = vld [vmem:[%s378 + $0x10] sm:$0xf]
    %v384 = vld [vmem:[%s378 + $0x14] sm:$0xf]
    %v385 = vld [vmem:[%s378 + $0x18] sm:$0xf]
    %v386 = vld [vmem:[%s378 + $0x1c] sm:$0xf]
    %v387 = vld [vmem:[%s378 + $0x20] sm:$0xf]
    %v388 = vld [vmem:[%s378 + $0x24] sm:$0xf]
    %v389 = vld [vmem:[%s378 + $0x28] sm:$0xf]
    %v390 = vld [vmem:[%s378 + $0x2c] sm:$0xf]
    %v391 = vld [vmem:[%s378 + $0x30] sm:$0xf]
    %v392 = vld [vmem:[%s378 + $0x34] sm:$0xf]
    %v393 = vld [vmem:[%s378 + $0x38] sm:$0xf]
    %v394 = vld [vmem:[%s378 + $0x3c] sm:$0xf]
    %v395 = vld [vmem:[%s2 + $0x4] sm:$0x1]
    %v396 = vperm.slane %v395, 0
    %v413 = vunpack.c.l.b16 %v379
    %v414 = vunpack.c.l.b16 %v380
    %v415 = vunpack.c.l.b16 %v381
    %v416 = vunpack.c.l.b16 %v382
    %v417 = vunpack.c.l.b16 %v383
    %v418 = vunpack.c.l.b16 %v384
    %v419 = vunpack.c.l.b16 %v385
    %v420 = vunpack.c.l.b16 %v386
    %v421 = vunpack.c.l.b16 %v387
    %v422 = vunpack.c.l.b16 %v388
    %v423 = vunpack.c.l.b16 %v389
    %v424 = vunpack.c.l.b16 %v390
    %v425 = vunpack.c.l.b16 %v391
    %v426 = vunpack.c.l.b16 %v392
    %v427 = vunpack.c.l.b16 %v393
    %v428 = vunpack.c.l.b16 %v394
    %v429 = vpack.c.b16 %v414, %v413
    %v430 = vpack.c.b16 %v416, %v415
    %v431 = vpack.c.b16 %v418, %v417
    %v432 = vpack.c.b16 %v420, %v419
    %v433 = vpack.c.b16 %v422, %v421
    %v434 = vpack.c.b16 %v424, %v423
    %v435 = vpack.c.b16 %v426, %v425
    %v436 = vpack.c.b16 %v428, %v427
    %445 = vmatpush.bf16.msra.mxu0 %v436
    %446 = vmatpush.bf16.msra.mxu0 %v435
    %447 = vmatpush.bf16.msra.mxu0 %v434
    %448 = vmatpush.bf16.msra.mxu0 %v433
    %449 = vmatpush.bf16.msra.mxu0 %v432
    %450 = vmatpush.bf16.msra.mxu0 %v431
    %451 = vmatpush.bf16.msra.mxu0 %v430
    %452 = vmatpush.bf16.msra.mxu0 %v429
    %453 = vmatmul.bf16.gmra.mxu0 %v377
    %v454 = vpop.f32.mrf.mxu0
    %v455 = vadd.f32 %v396, %v454
    %v456 = vpop.f32.mrf.mxu0
    %v457 = vadd.f32 %v396, %v456
    %458 = vdwg.mxu0
    %vm459 = vcmp.ge.f32.partialorder %v455, 0.0
    %vm460 = vcmp.ge.f32.partialorder %v457, 0.0
    %v461 = vmul.f32 %v455, 0.01
    %v462 = vmul.f32 %v457, 0.01
    %v463 = vsel %vm459, %v455, %v461
    %v464 = vsel %vm460, %v457, %v462
    %vm465 = vcmask 64512
    %466 = vst.msk [vmem:[%s3] sm:$0xff] %vm465, %v463
    %467 = vst.msk [vmem:[%s3 + $0x8] sm:$0xff] %vm465, %v464
    // Predicated region
    $region18: #{forward.1} parent=1 // pred_check
      _
    $region19: #{forward.1} parent=1 // pred_check_branch
      %469 = sbr.rel (0) target = $region21
    $region20: #{forward.1} parent=1 // pred_region
      _
    $region21: #{forward.1} parent=1 // pred_fallthru
      _
    // Predicated region
    $region22: #{forward.1} parent=1 // pred_check
      _
    $region23: #{forward.1} parent=1 // pred_check_branch
      %471 = sbr.rel (0) target = $region25
    $region24: #{forward.1} parent=1 // pred_region
      _
    $region25: #{forward.1} parent=1 // pred_fallthru
      _
    %472 = vsyncpa [#allocation3], 1

</llo_original>
